<compile_context>
chip_gen: v7x
topology: tpu7x:2x2x1
jax: 0.10.0
libtpu: 0.0.40
codegen_flags: <defaults>
</compile_context>

<pallas_src>
import functools

import jax
import jax.numpy as jnp
from jax.experimental import pallas as pl
from jax.experimental.pallas import tpu as pltpu


def _round_up(x, m):
    return ((x + m - 1) // m) * m


def _cdiv(a, b):
    return -(-a // b)


# -----------------------------------------------------------------------------
# Kernels
# -----------------------------------------------------------------------------
def _make_ffn_kernel(compute_dtype, mode):
    """mode in {'single', 'multi_f32', 'multi_acc'}."""
    if mode == "single":
        # Single dff step: no accumulator, no phase gating.
        def ffn_kernel(x_ref, w1_ref, b1_ref, w2_ref, b2_ref, o_ref):
            x = x_ref[...].astype(compute_dtype)
            h = jnp.dot(x, w1_ref[...], preferred_element_type=jnp.float32)
            h = jnp.maximum(h + b1_ref[...], 0.0)  # bias + ReLU in f32
            y = jnp.dot(h.astype(compute_dtype), w2_ref[...],
                        preferred_element_type=jnp.float32)
            o_ref[...] = (y + b2_ref[...]).astype(o_ref.dtype)

    elif mode == "multi_f32":
        # Streamed dff slices, f32 output: accumulate straight into the
        # (VMEM-resident) output block -> no separate f32 scratch.
        def ffn_kernel(x_ref, w1_ref, b1_ref, w2_ref, b2_ref, o_ref):
            k = pl.program_id(1)

            @pl.when(k == 0)
            def _():
                o_ref[...] = jnp.zeros_like(o_ref)

            x = x_ref[...].astype(compute_dtype)
            h = jnp.dot(x, w1_ref[...], preferred_element_type=jnp.float32)
            h = jnp.maximum(h + b1_ref[...], 0.0)
            o_ref[...] += jnp.dot(h.astype(compute_dtype), w2_ref[...],
                                  preferred_element_type=jnp.float32)

            @pl.when(k == pl.num_programs(1) - 1)
            def _():
                o_ref[...] = o_ref[...] + b2_ref[...]

    else:  # "multi_acc"
        # Streamed dff slices, non-f32 output: accumulate in an f32 scratch.
        def ffn_kernel(x_ref, w1_ref, b1_ref, w2_ref, b2_ref, o_ref, acc_ref):
            k = pl.program_id(1)

            @pl.when(k == 0)
            def _():
                acc_ref[...] = jnp.zeros_like(acc_ref)

            x = x_ref[...].astype(compute_dtype)
            h = jnp.dot(x, w1_ref[...], preferred_element_type=jnp.float32)
            h = jnp.maximum(h + b1_ref[...], 0.0)
            acc_ref[...] += jnp.dot(h.astype(compute_dtype), w2_ref[...],
                                    preferred_element_type=jnp.float32)

            @pl.when(k == pl.num_programs(1) - 1)
            def _():
                o_ref[...] = (acc_ref[...] + b2_ref[...]).astype(o_ref.dtype)

    return ffn_kernel


# -----------------------------------------------------------------------------
# Tile / regime selection
# -----------------------------------------------------------------------------
def _vmem_info():
    try:
        info = pltpu.get_tpu_info()
        cap = int(getattr(info, "vmem_capacity_bytes", 64 << 20))
    except Exception:
        cap = 64 << 20  # conservative (v7x-like) fallback
    budget = min((cap * 3) // 4, 100 << 20)
    return cap, budget


def _select_config(M, d_model, dff, x_bytes, out_bytes, c_bytes):
    cap, budget = _vmem_info()
    small_vmem = cap <= (64 << 20)      # v7x-like: 64 MiB per TC, 2 TCs/chip
    usable = budget - (2 << 20)         # headroom for compiler temporaries

    # Weight slices are re-streamed once per row tile (unless resident), so
    # arithmetic intensity ~ tm flops per weight byte -> size tm per roofline.
    tm_pref = 512 if small_vmem else 768

    M_grid = M if M >= 16 else 16       # rows actually covered by the grid
    row_cap = (M_grid // 16) * 16       # tm: multiple of 16, <= row count
    tm = min(tm_pref, row_cap)

    def fixed_bytes(tm_):
        return (2 * tm_ * d_model * x_bytes        # x blocks, double-buffered
                + 2 * tm_ * d_model * out_bytes    # out blocks, double-buffered
                + tm_ * d_model * 4                # f32 accumulator (worst case)
                + 2 * (dff + d_model) * 4)         # biases

    # --- weights-resident regime ---------------------------------------------
    w_full = 2 * d_model * dff * c_bytes
    h_full = tm * dff * (4 + c_bytes)              # f32 intermediate + bf16 copy
    resident = (w_full + h_full + fixed_bytes(tm)) <= usable // 2

    if resident:
        tdff, dff_pad = dff, dff
    else:
        def stream_fits(tm_, tdff_):
            w_tiles = 2 * 2 * d_model * tdff_ * c_bytes   # w1+w2 slices, 2 buffers
            h = tm_ * tdff_ * (4 + c_bytes)
            return w_tiles + h + fixed_bytes(tm_) <= usable

        tdff = None
        for cand in (512, 256, 128):               # keep DMA chunks >= 256 B/row
            if stream_fits(tm, cand):
                tdff = cand
                break
        while tdff is None and tm > 16:
            tm = max(16, _round_up(tm // 2, 16))
            for cand in (512, 256, 128):
                if stream_fits(tm, cand):
                    tdff = cand
                    break
        if tdff is None:
            tm, tdff = 16, 128                     # last resort
        tdff = min(tdff, _round_up(dff, 128))

        if dff % tdff == 0:
            dff_pad = dff
        else:
            # Largest 128-multiple divisor of dff <= tdff, else zero-pad dff.
            best_div, t = 0, 128
            while t <= min(dff, tdff):
                if dff % t == 0:
                    best_div = t
                t += 128
            if best_div >= 256:
                tdff, dff_pad = best_div, dff
            else:
                dff_pad = _round_up(dff, tdff)

    # --- megacore: make sure the "parallel" row axis has >= 2 tiles ----------
    # (free when weights are resident; required on 2-TC chips for utilization)
    if _cdiv(M_grid, tm) == 1 and M_grid >= 32 and (resident or small_vmem):
        tm = _round_up(_cdiv(M_grid, 2), 16)

    return tm, tdff, dff_pad, resident, budget


# -----------------------------------------------------------------------------
# Wrapper
# -----------------------------------------------------------------------------
@functools.partial(jax.jit, static_argnames=("compute_dtype",))
def feed_forward(x, w1, b1, w2, b2, *, compute_dtype=jnp.bfloat16):
    """x: (..., d_model). Returns relu(x @ w1 + b1) @ w2 + b2, same shape/dtype as x."""
    orig_shape = x.shape
    out_dtype = x.dtype
    d_model = x.shape[-1]
    dff = w1.shape[1]

    x2d = x.reshape(-1, d_model)
    M = x2d.shape[0]
    if M == 0:
        return jnp.zeros(orig_shape, dtype=out_dtype)

    x_bytes = jnp.dtype(x.dtype).itemsize
    out_bytes = jnp.dtype(out_dtype).itemsize
    c_bytes = jnp.dtype(compute_dtype).itemsize

    tm, tdff, dff_pad, resident, vmem_budget = _select_config(
        M, d_model, dff, x_bytes, out_bytes, c_bytes)

    # Rows: pad only when M < 16; otherwise the last row tile is partial and
    # Mosaic masks the edge (no full-size pad copy, no wrapper cast of x).
    M_grid = M
    if M < 16:
        M_grid = 16
        x2d = jnp.pad(x2d, ((0, M_grid - M), (0, 0)))

    grid_m = _cdiv(M_grid, tm)
    n_dff = dff_pad // tdff
    grid = (grid_m, n_dff)

    # Weights: bf16 MXU operands; biases in f32. Zero-pad the hidden dim if
    # needed (zero columns of w1 / zero b1 / zero rows of w2 are inert).
    w1c = w1.astype(compute_dtype)
    w2c = w2.astype(compute_dtype)
    b1f = b1.reshape(1, dff).astype(jnp.float32)
    b2f = b2.reshape(1, d_model).astype(jnp.float32)
    if dff_pad != dff:
        pad = dff_pad - dff
        w1c = jnp.pad(w1c, ((0, 0), (0, pad)))
        b1f = jnp.pad(b1f, ((0, 0), (0, pad)))
        w2c = jnp.pad(w2c, ((0, pad), (0, 0)))

    def w_spec(shape, index_map):
        if resident:  # constant across the whole grid -> single buffer
            return pl.BlockSpec(shape, index_map, pipeline_mode=pl.Buffered(1))
        return pl.BlockSpec(shape, index_map)  # streamed -> default double buffer

    in_specs = [
        # x rows stream with the row axis; reused across the dff axis.
        pl.BlockSpec((tm, d_model), lambda i, k: (i, 0)),
        # w1 / b1 / w2 stream along the dff (reduction) axis, or stay resident.
        w_spec((d_model, tdff), lambda i, k: (0, k)),
        w_spec((1, tdff), lambda i, k: (0, k)),
        w_spec((tdff, d_model), lambda i, k: (k, 0)),
        # b2 is grid-invariant -> single buffer.
        pl.BlockSpec((1, d_model), lambda i, k: (0, 0),
                     pipeline_mode=pl.Buffered(1)),
    ]
    out_spec = pl.BlockSpec((tm, d_model), lambda i, k: (i, 0))

    if n_dff == 1:
        mode, scratch = "single", []
    elif jnp.dtype(out_dtype) == jnp.dtype(jnp.float32):
        mode, scratch = "multi_f32", []
    else:
        mode, scratch = "multi_acc", [pltpu.VMEM((tm, d_model), jnp.float32)]
    kernel = _make_ffn_kernel(compute_dtype, mode)

    # Advisory cost estimate (weights re-streamed per row tile unless resident).
    w_factor = 1 if resident else grid_m
    flops = 4 * M_grid * d_model * dff_pad
    bytes_accessed = (
        M_grid * d_model * x_bytes
        + w_factor * (2 * d_model * dff_pad * c_bytes + dff_pad * 4)
        + d_model * 4
        + M_grid * d_model * out_bytes)
    cost = pl.CostEstimate(flops=flops, transcendentals=0,
                           bytes_accessed=bytes_accessed)

    out2d = pl.pallas_call(
        kernel,
        out_shape=jax.ShapeDtypeStruct((M_grid, d_model), out_dtype),
        grid_spec=pltpu.PrefetchScalarGridSpec(
            num_scalar_prefetch=0,
            grid=grid,
            in_specs=in_specs,
            out_specs=out_spec,
            scratch_shapes=scratch,
        ),
        compiler_params=pltpu.CompilerParams(
            dimension_semantics=("parallel", "arbitrary"),
            vmem_limit_bytes=vmem_budget,
        ),
        cost_estimate=cost,
    )(x2d, w1c, b1f, w2c, b2f)

    if M_grid != M:
        out2d = out2d[:M]
    return out2d.reshape(orig_shape)


# -----------------------------------------------------------------------------
# Self-test
# -----------------------------------------------------------------------------
if __name__ == "__main__":
    # Small shapes consistent with a Transformer feed-forward block.
    batch, seq, d_model, dim_feedforward = 2, 8, 32, 64

    key = jax.random.PRNGKey(0)
    kx, kw1, kb1, kw2, kb2 = jax.random.split(key, 5)

    x = jax.random.normal(kx, (batch, seq, d_model), dtype=jnp.float32)

    # Deterministic parameter init (PyTorch nn.Linear-like uniform bounds).
    bound1 = 1.0 / (d_model ** 0.5)
    w1 = jax.random.uniform(kw1, (d_model, dim_feedforward),
                            minval=-bound1, maxval=bound1, dtype=jnp.float32)
    b1 = jax.random.uniform(kb1, (dim_feedforward,),
                            minval=-bound1, maxval=bound1, dtype=jnp.float32)
    bound2 = 1.0 / (dim_feedforward ** 0.5)
    w2 = jax.random.uniform(kw2, (dim_feedforward, d_model),
                            minval=-bound2, maxval=bound2, dtype=jnp.float32)
    b2 = jax.random.uniform(kb2, (d_model,),
                            minval=-bound2, maxval=bound2, dtype=jnp.float32)

    out = jax.block_until_ready(feed_forward(x, w1, b1, w2, b2))

    # Pure-JAX f32 reference. Kernel uses bf16 MXU operands with f32
    # accumulation, so compare with a correspondingly loose tolerance.
    ref = jnp.maximum(x @ w1 + b1, 0.0) @ w2 + b2
    assert out.shape == x.shape
    err = float(jnp.max(jnp.abs(out - ref)))
    assert jnp.allclose(out, ref, atol=3e-2, rtol=3e-2), f"max abs err = {err}"

    print("KERNEL_OK")
</pallas_src>

<mosaic_0001>
module attributes {stable_mosaic.version = 11 : i64} {
  func.func @ffn_kernel(%arg0: i32, %arg1: i32, %arg2: memref<16x32xf32, #tpu.memory_space<vmem>>, %arg3: memref<32x64xbf16, #tpu.memory_space<vmem>>, %arg4: memref<1x64xf32, #tpu.memory_space<vmem>>, %arg5: memref<64x32xbf16, #tpu.memory_space<vmem>>, %arg6: memref<1x32xf32, #tpu.memory_space<vmem>>, %arg7: memref<16x32xf32, #tpu.memory_space<vmem>>) attributes {dimension_semantics = [#tpu.dimension_semantics<parallel>, #tpu.dimension_semantics<arbitrary>], iteration_bounds = array<i64: 1, 1>, scalar_prefetch = 0 : i64, scratch_operands = 0 : i64, tpu.core_type = #tpu.core_type<tc>, window_params = [{transform_indices = @transform_0, window_bounds = array<i64: 16, 32>}, {pipeline_mode = #tpu.pipeline_mode<synchronous>, transform_indices = @transform_1, window_bounds = array<i64: 32, 64>}, {pipeline_mode = #tpu.pipeline_mode<synchronous>, transform_indices = @transform_2, window_bounds = array<i64: 1, 64>}, {pipeline_mode = #tpu.pipeline_mode<synchronous>, transform_indices = @transform_3, window_bounds = array<i64: 64, 32>}, {pipeline_mode = #tpu.pipeline_mode<synchronous>, transform_indices = @transform_4, window_bounds = array<i64: 1, 32>}, {transform_indices = @transform_5, window_bounds = array<i64: 16, 32>}]} {
    %c0 = arith.constant 0 : index
    %c0_0 = arith.constant 0 : index
    %0 = vector.load %arg2[%c0, %c0_0] : memref<16x32xf32, #tpu.memory_space<vmem>>, vector<16x32xf32>
    %1 = arith.truncf %0 : vector<16x32xf32> to vector<16x32xbf16>
    %c0_1 = arith.constant 0 : index
    %c0_2 = arith.constant 0 : index
    %2 = vector.load %arg3[%c0_1, %c0_2] : memref<32x64xbf16, #tpu.memory_space<vmem>>, vector<32x64xbf16>
    %cst = arith.constant dense<0.000000e+00> : vector<16x64xf32>
    %3 = tpu.matmul %1, %2, %cst {dimension_numbers = #tpu.dot_dimension_numbers<[1], [0], [0], [1], [0, 0, 1, 1], [], []>} : vector<16x32xbf16>, vector<32x64xbf16>, vector<16x64xf32> -> vector<16x64xf32>
    %c0_3 = arith.constant 0 : index
    %c0_4 = arith.constant 0 : index
    %4 = vector.load %arg4[%c0_3, %c0_4] : memref<1x64xf32, #tpu.memory_space<vmem>>, vector<1x64xf32>
    %5 = vector.broadcast %4 : vector<1x64xf32> to vector<16x64xf32>
    %6 = arith.addf %3, %5 : vector<16x64xf32>
    %cst_5 = arith.constant 0.000000e+00 : f32
    %7 = vector.broadcast %cst_5 : f32 to vector<16x64xf32>
    %8 = arith.maximumf %6, %7 : vector<16x64xf32>
    %9 = arith.truncf %8 : vector<16x64xf32> to vector<16x64xbf16>
    %c0_6 = arith.constant 0 : index
    %c0_7 = arith.constant 0 : index
    %10 = vector.load %arg5[%c0_6, %c0_7] : memref<64x32xbf16, #tpu.memory_space<vmem>>, vector<64x32xbf16>
    %cst_8 = arith.constant dense<0.000000e+00> : vector<16x32xf32>
    %11 = tpu.matmul %9, %10, %cst_8 {dimension_numbers = #tpu.dot_dimension_numbers<[1], [0], [0], [1], [0, 0, 1, 1], [], []>} : vector<16x64xbf16>, vector<64x32xbf16>, vector<16x32xf32> -> vector<16x32xf32>
    %c0_9 = arith.constant 0 : index
    %c0_10 = arith.constant 0 : index
    %12 = vector.load %arg6[%c0_9, %c0_10] : memref<1x32xf32, #tpu.memory_space<vmem>>, vector<1x32xf32>
    %13 = vector.broadcast %12 : vector<1x32xf32> to vector<16x32xf32>
    %14 = arith.addf %11, %13 : vector<16x32xf32>
    %c0_11 = arith.constant 0 : index
    %c0_12 = arith.constant 0 : index
    %15 = vector.load %arg7[%c0_11, %c0_12] : memref<16x32xf32, #tpu.memory_space<vmem>>, vector<16x32xf32>
    tpu.vector_store %arg7[%c0_11, %c0_12], %14 {strides = array<i32>} : memref<16x32xf32, #tpu.memory_space<vmem>>, vector<16x32xf32>,
    return
  }
  func.func @transform_0(%arg0: i32, %arg1: i32) -> (i32, i32) {
    %c0_i32 = arith.constant 0 : i32
    %c0_i32_0 = arith.constant 0 : i32
    return %arg0, %c0_i32 : i32, i32
  }
  func.func @transform_1(%arg0: i32, %arg1: i32) -> (i32, i32) {
    %c0_i32 = arith.constant 0 : i32
    %c0_i32_0 = arith.constant 0 : i32
    return %c0_i32, %arg1 : i32, i32
  }
  func.func @transform_2(%arg0: i32, %arg1: i32) -> (i32, i32) {
    %c0_i32 = arith.constant 0 : i32
    %c0_i32_0 = arith.constant 0 : i32
    return %c0_i32, %arg1 : i32, i32
  }
  func.func @transform_3(%arg0: i32, %arg1: i32) -> (i32, i32) {
    %c0_i32 = arith.constant 0 : i32
    %c0_i32_0 = arith.constant 0 : i32
    return %arg1, %c0_i32 : i32, i32
  }
  func.func @transform_4(%arg0: i32, %arg1: i32) -> (i32, i32) {
    %c0_i32 = arith.constant 0 : i32
    %c0_i32_0 = arith.constant 0 : i32
    %c0_i32_1 = arith.constant 0 : i32
    return %c0_i32, %c0_i32_0 : i32, i32
  }
  func.func @transform_5(%arg0: i32, %arg1: i32) -> (i32, i32) {
    %c0_i32 = arith.constant 0 : i32
    %c0_i32_0 = arith.constant 0 : i32
    return %arg0, %c0_i32 : i32, i32
  }
}

</mosaic_0001>

<llo_original>
// kernel: feed_forward.1
$region0: #{feed_forward.1}
  #allocation0 [shape = 'u32[]', space=smem, size = 0x4, offset = 0x4, fixed_abs, tag = 'smem constant byte address 0x4 - core index']
  #allocation1 [shape = 'u32[144,128]{1,0:T(1,128)}', space=vmem, size = 0x12000, scoped, tag = 'internal scratch']
  %s0 = inlined_call_operand.vmem [shape: f32[16,32], index: 0, kind: input, shape index: {}]
  %s1 = inlined_call_operand.vmem [shape: bf16[32,64], index: 1, kind: input, shape index: {}]
  %s2 = inlined_call_operand.vmem [shape: f32[1,64], index: 2, kind: input, shape index: {}]
  %s3 = inlined_call_operand.vmem [shape: bf16[64,32], index: 3, kind: input, shape index: {}]
  %s4 = inlined_call_operand.vmem [shape: f32[1,32], index: 4, kind: input, shape index: {}]
  %s5 = inlined_call_operand.hbm [shape: f32[16,32], index: 5, kind: output, shape index: {}]
  %s6 = sld [smem:[#allocation0]]
  $region30: #{feed_forward.1} parent=0
    _
  %s8 = ssub.s32 1, %s6
  %s9 = scalar_select 0, %s8, %s6
  $region1: #{feed_forward.1} parent=0
    #allocation2 [shape = 'u8[8192]{0}', space=vmem, size = 0x2000, scoped, tag = 'output window, operand 0, single buffered']
    #allocation3 [shape = 's32[1]{0}', space=sflag, size = 0x4, scoped, tag = 'scoped memory for feed_forward.1']
    %10 = vsyncpa [#allocation3], 0
    // Predicated region
    $region2: #{feed_forward.1} parent=1 // pred_check
      _
    $region3: #{feed_forward.1} parent=1 // pred_check_branch
      %12 = sbr.rel (0) target = $region5
    $region4: #{feed_forward.1} parent=1 // pred_region
      _
    $region5: #{feed_forward.1} parent=1 // pred_fallthru
      _
    // Predicated region
    $region6: #{feed_forward.1} parent=1 // pred_check
      _
    $region7: #{feed_forward.1} parent=1 // pred_check_branch
      %14 = sbr.rel (0) target = $region9
    $region8: #{feed_forward.1} parent=1 // pred_region
      _
    $region9: #{feed_forward.1} parent=1 // pred_fallthru
      _
    // Predicated region
    $region10: #{feed_forward.1} parent=1 // pred_check
      _
    $region11: #{feed_forward.1} parent=1 // pred_check_branch
      %16 = sbr.rel (0) target = $region13
    $region12: #{feed_forward.1} parent=1 // pred_region
      _
    $region13: #{feed_forward.1} parent=1 // pred_fallthru
      _
    // Predicated region
    $region14: #{feed_forward.1} parent=1 // pred_check
      _
    $region15: #{feed_forward.1} parent=1 // pred_check_branch
      %18 = sbr.rel (0) target = $region17
    $region16: #{feed_forward.1} parent=1 // pred_region
      _
    $region17: #{feed_forward.1} parent=1 // pred_fallthru
      _
    // Predicated region
    $region18: #{feed_forward.1} parent=1 // pred_check
      _
    $region19: #{feed_forward.1} parent=1 // pred_check_branch
      %20 = sbr.rel (0) target = $region21
    $region20: #{feed_forward.1} parent=1 // pred_region
      _
    $region21: #{feed_forward.1} parent=1 // pred_fallthru
      _
    %v22 = vld [vmem:[%s0] sm:$0xff]
    %v23 = vld [vmem:[%s0 + $0x8] sm:$0xff]
    %v24 = vpack.c.bf16 %v23, %v22
    %v25 = vld [vmem:[%s1] sm:$0xf]
    %v26 = vld [vmem:[%s1 + $0x4] sm:$0xf]
    %v27 = vld [vmem:[%s1 + $0x8] sm:$0xf]
    %v28 = vld [vmem:[%s1 + $0xc] sm:$0xf]
    %v29 = vld [vmem:[%s2] sm:$0x1]
    %v31 = vlaneseq
    %v32 = vshrl.u32 %v31, 7
    %v33 = vsub.s32 0, %v32
    %v34 = vrot.slane %v29, %v33
    %v40 = vunpack.c.l.b16 %v25
    %v41 = vunpack.c.l.b16 %v26
    %v42 = vunpack.c.l.b16 %v27
    %v43 = vunpack.c.l.b16 %v28
    %v44 = vpack.c.b16 %v41, %v40
    %v45 = vpack.c.b16 %v43, %v42
    %vm48 = vcmask 261120
    %v50 = vsel %vm48, %v24, 0
    %52 = vmatprep.subr.bf16.mxu0 0
    %53 = vmatpush1.bf16.msra.mxu0 %v44
    %54 = vmatprep.subr.bf16.mxu0 0
    %55 = vmatpush1.bf16.msra.mxu0 %v45
    %56 = vmatprep.subr.bf16.mxu0 0
    %57 = vmatpush1.bf16.msra.mxu0 0
    %58 = vmatprep.subr.bf16.mxu0 0
    %59 = vmatpush1.bf16.msra.mxu0 0
    %60 = vmatprep.subr.bf16.mxu0 0
    %61 = vmatpush1.bf16.msra.mxu0 0
    %62 = vmatprep.subr.bf16.mxu0 0
    %63 = vmatpush1.bf16.msra.mxu0 0
    %64 = vmatprep.subr.bf16.mxu0 0
    %65 = vmatpush1.bf16.msra.mxu0 0
    %66 = vmatprep.subr.bf16.mxu0 0
    %67 = vmatpush1.bf16.msra.mxu0 0
    %68 = vmatprep.subr.bf16.mxu0 0
    %69 = vmatpush1.bf16.msra.mxu0 0
    %70 = vmatprep.subr.bf16.mxu0 0
    %71 = vmatpush1.bf16.msra.mxu0 0
    %72 = vmatprep.subr.bf16.mxu0 0
    %73 = vmatpush1.bf16.msra.mxu0 0
    %74 = vmatprep.subr.bf16.mxu0 0
    %75 = vmatpush1.bf16.msra.mxu0 0
    %76 = vmatprep.subr.bf16.mxu0 0
    %77 = vmatpush1.bf16.msra.mxu0 0
    %78 = vmatprep.subr.bf16.mxu0 0
    %79 = vmatpush1.bf16.msra.mxu0 0
    %80 = vmatprep.subr.bf16.mxu0 0
    %81 = vmatpush1.bf16.msra.mxu0 0
    %82 = vmatprep.subr.bf16.mxu0 0
    %83 = vmatpush1.bf16.msra.mxu0 0
    %84 = vmatprep.mubr.bf16.mxu0 0
    %85 = vmatmul.mubr.bf16.gmra.mrb[0].mxu0 %v50
    %v86 = vpop.f32.mrb[0].mxu0
    %v87 = vadd.f32 %v34, %v86
    %v88 = vpop.f32.mrb[0].mxu0
    %v89 = vpop.f32.mrb[0].mxu0
    %v90 = vadd.f32 %v34, %v89
    %v91 = vpop.f32.mrb[0].mxu0
    %92 = vdwg.mxu0
    %v93 = vmax.f32 %v87, 0.0
    %v94 = vmax.f32 %v90, 0.0
    %v95 = vpack.c.bf16 %v94, %v93
    %v96 = vld [vmem:[%s3] sm:$0xf]
    %v97 = vld [vmem:[%s3 + $0x4] sm:$0xf]
    %v98 = vld [vmem:[%s3 + $0x8] sm:$0xf]
    %v99 = vld [vmem:[%s3 + $0xc] sm:$0xf]
    %v100 = vld [vmem:[%s3 + $0x10] sm:$0xf]
    %v101 = vld [vmem:[%s3 + $0x14] sm:$0xf]
    %v102 = vld [vmem:[%s3 + $0x18] sm:$0xf]
    %v103 = vld [vmem:[%s3 + $0x1c] sm:$0xf]
    %v104 = vld [vmem:[%s4] sm:$0x1]
    %v106 = vlaneseq
    %v107 = vshrl.u32 %v106, 7
    %v108 = vsub.s32 0, %v107
    %v109 = vrot.slane %v104, %v108
    %v119 = vunpack.c.l.b16 %v96
    %v120 = vunpack.c.l.b16 %v97
    %v121 = vunpack.c.l.b16 %v98
    %v122 = vunpack.c.l.b16 %v99
    %v123 = vunpack.c.l.b16 %v100
    %v124 = vunpack.c.l.b16 %v101
    %v125 = vunpack.c.l.b16 %v102
    %v126 = vunpack.c.l.b16 %v103
    %v127 = vpack.c.b16 %v120, %v119
    %v128 = vpack.c.b16 %v122, %v121
    %v129 = vpack.c.b16 %v124, %v123
    %v130 = vpack.c.b16 %v126, %v125
    %vm135 = vcmask 523264
    %v137 = vsel %vm135, %v95, 0
    %139 = vmatprep.subr.bf16.mxu0 0
    %140 = vmatpush1.bf16.msra.mxu0 %v127
    %141 = vmatprep.subr.bf16.mxu0 0
    %142 = vmatpush1.bf16.msra.mxu0 %v128
    %143 = vmatprep.subr.bf16.mxu0 0
    %144 = vmatpush1.bf16.msra.mxu0 %v129
    %145 = vmatprep.subr.bf16.mxu0 0
    %146 = vmatpush1.bf16.msra.mxu0 %v130
    %147 = vmatprep.subr.bf16.mxu0 0
    %148 = vmatpush1.bf16.msra.mxu0 0
    %149 = vmatprep.subr.bf16.mxu0 0
    %150 = vmatpush1.bf16.msra.mxu0 0
    %151 = vmatprep.subr.bf16.mxu0 0
    %152 = vmatpush1.bf16.msra.mxu0 0
    %153 = vmatprep.subr.bf16.mxu0 0
    %154 = vmatpush1.bf16.msra.mxu0 0
    %155 = vmatprep.subr.bf16.mxu0 0
    %156 = vmatpush1.bf16.msra.mxu0 0
    %157 = vmatprep.subr.bf16.mxu0 0
    %158 = vmatpush1.bf16.msra.mxu0 0
    %159 = vmatprep.subr.bf16.mxu0 0
    %160 = vmatpush1.bf16.msra.mxu0 0
    %161 = vmatprep.subr.bf16.mxu0 0
    %162 = vmatpush1.bf16.msra.mxu0 0
    %163 = vmatprep.subr.bf16.mxu0 0
    %164 = vmatpush1.bf16.msra.mxu0 0
    %165 = vmatprep.subr.bf16.mxu0 0
    %166 = vmatpush1.bf16.msra.mxu0 0
    %167 = vmatprep.subr.bf16.mxu0 0
    %168 = vmatpush1.bf16.msra.mxu0 0
    %169 = vmatprep.subr.bf16.mxu0 0
    %170 = vmatpush1.bf16.msra.mxu0 0
    %171 = vmatprep.mubr.bf16.mxu0 0
    %172 = vmatmul.mubr.bf16.gmra.mrb[0].mxu0 %v137
    %v173 = vpop.f32.mrb[0].mxu0
    %v174 = vadd.f32 %v109, %v173
    %v175 = vpop.f32.mrb[0].mxu0
    %v176 = vpop.f32.mrb[0].mxu0
    %v177 = vadd.f32 %v109, %v176
    %v178 = vpop.f32.mrb[0].mxu0
    %179 = vdwg.mxu0
    %180 = vst.msk [vmem:[#allocation2] sm:$0xff] %vm48, %v174
    %181 = vst.msk [vmem:[#allocation2 + $0x8] sm:$0xff] %vm48, %v177
    // Predicated region
    $region22: #{feed_forward.1} parent=1 // pred_check
      _
    $region23: #{feed_forward.1} parent=1 // pred_check_branch
      %183 = sbr.rel (0) target = $region25
    $region24: #{feed_forward.1} parent=1 // pred_region
      %s185 = ssub.s32 256, 256
      %186 = vsyncadd [#allocation3], %s185
      %s187 = sshll.u32 [#allocation2], 4
      %s188 = int_to_ptr.vmem [resolvable:$true] %s187
      %193 = dma.vmem_to_hbm [thread:$0]  %s188, 256, %s5, [#allocation3], 128, 128, 8
    $region25: #{feed_forward.1} parent=1 // pred_fallthru
      _
    // Predicated region
    $region26: #{feed_forward.1} parent=1 // pred_check
      _
    $region27: #{feed_forward.1} parent=1 // pred_check_branch
      %195 = sbr.rel (0) target = $region29
    $region28: #{feed_forward.1} parent=1 // pred_region
      %196 = dma.done [#allocation3], 256
    $region29: #{feed_forward.1} parent=1 // pred_fallthru
      _
    %197 = vsyncpa [#allocation3], 1

</llo_original>
